<compile_context>
chip_gen: v6e
topology: v6e:2x2x1
jax: 0.10.0
libtpu: 0.0.40
codegen_flags: <defaults>
</compile_context>

<pallas_src>
import functools

import numpy as np
import jax
import jax.numpy as jnp
from jax import lax
from jax.experimental import pallas as pl
from jax.experimental.pallas import tpu as pltpu


def downscale2d_kernel(x_ref, g_ref, o_ref):
    # Single dense MXU matmul: (row_tile, H*W) @ (H*W, pad128(Ho*Wo)).
    o_ref[...] = jnp.dot(
        x_ref[...], g_ref[...], preferred_element_type=jnp.float32
    ).astype(o_ref.dtype)


def _pick_row_tile(n_rows):
    # Prefer >=2 sublane-aligned row tiles so the "parallel" grid axis lets
    # v7x's two TensorCores split the batch; otherwise one full block.
    if n_rows % 8 == 0 and n_rows >= 16:
        tile = (n_rows // 2) // 8 * 8
        while n_rows % tile != 0:
            tile -= 8
        return tile
    return n_rows


def _build_pool_matrix(H, W, Ho, Wo, factor, gain, out_pad):
    """G[p, q] = gain/f^2 if flattened input pixel p is in output pixel q's window."""
    HW = H * W
    p = np.arange(HW)
    py, px = p // W, p % W
    q = np.arange(out_pad)
    qy, qx = q // Wo, q % Wo
    hit = ((py[:, None] // factor) == qy[None, :]) \
        & ((px[:, None] // factor) == qx[None, :]) \
        & (q[None, :] < Ho * Wo)
    return (hit.astype(np.float32) * (gain / float(factor * factor)))


@functools.partial(jax.jit, static_argnames=("factor", "gain"))
def downscale2d_forward(x, factor=2, gain=1.0):
    """x: (B, C, H, W) float32, NCHW (PyTorch layout). Returns (B, C, H/f, W/f)."""
    assert x.ndim == 4
    B, C, H, W = x.shape
    # PyTorch floors non-divisible spatial dims; we require divisibility here.
    assert H % factor == 0 and W % factor == 0
    Ho, Wo = H // factor, W // factor
    HW, HoWo = H * W, Ho * Wo
    HoWo_pad = max(128, pl.cdiv(HoWo, 128) * 128)   # lane-dense (unmasked) stores
    n_rows = B * C
    row_tile = _pick_row_tile(n_rows)

    # Glue: constant pooling matrix + contiguous (free) flatten of activations.
    g = jnp.asarray(_build_pool_matrix(H, W, Ho, Wo, factor, float(gain), HoWo_pad))
    x_flat = x.reshape(n_rows, HW).astype(jnp.float32)

    out_pad = pl.pallas_call(
        downscale2d_kernel,
        out_shape=jax.ShapeDtypeStruct((n_rows, HoWo_pad), jnp.float32),
        grid=(n_rows // row_tile,),
        in_specs=[
            pl.BlockSpec((row_tile, HW), lambda i: (i, 0)),
            pl.BlockSpec((HW, HoWo_pad), lambda i: (0, 0)),
        ],
        out_specs=pl.BlockSpec((row_tile, HoWo_pad), lambda i: (i, 0)),
        compiler_params=pltpu.CompilerParams(dimension_semantics=("parallel",)),
    )(x_flat, g)

    # Back to NCHW (glue): drop the lane padding, unflatten the spatial dims.
    return out_pad[:, :HoWo].reshape(B, C, Ho, Wo)


def reference_downscale2d(x, factor=2, gain=1.0):
    """Pure-JAX NCHW reference mirroring the PyTorch forward branches."""
    B, C, H, W = x.shape
    if factor == 2:
        # BlurLayer path: depthwise 2x2 conv, stride 2, padding 0.
        k1 = jnp.full((factor,), (gain ** 0.5) / factor, jnp.float32)
        k2 = k1[:, None] * k1[None, :]
        kernel = jnp.broadcast_to(k2[None, None], (C, 1, factor, factor))
        return lax.conv_general_dilated(
            x, kernel, window_strides=(factor, factor), padding="VALID",
            dimension_numbers=("NCHW", "OIHW", "NCHW"),
            feature_group_count=C, precision=lax.Precision.HIGHEST)
    if gain != 1.0:
        x = x * gain
    if factor == 1:
        return x
    summed = lax.reduce_window(x, 0.0, lax.add,
                               (1, 1, factor, factor),
                               (1, 1, factor, factor), "VALID")
    return summed / float(factor * factor)


if __name__ == "__main__":
    B, C, H, W = 2, 8, 16, 16        # B*C = 16 rows -> two parallel grid tiles
    factor, gain = 2, 1.0            # default Downscale2d construction

    key = jax.random.PRNGKey(0)
    x = jax.random.normal(key, (B, C, H, W), jnp.float32)

    out = jax.block_until_ready(downscale2d_forward(x, factor=factor, gain=gain))
    ref = reference_downscale2d(x, factor=factor, gain=gain)

    assert out.shape == (B, C, H // factor, W // factor) and out.dtype == jnp.float32
    # Tolerance only accounts for reduced-precision f32 matmul passes on the MXU.
    assert jnp.allclose(out, ref, rtol=2e-2, atol=2e-2), \
        float(jnp.max(jnp.abs(out - ref)))
    print("KERNEL_OK")
</pallas_src>

<mosaic_0001>
module attributes {stable_mosaic.version = 11 : i64} {
  func.func @downscale2d_kernel(%arg0: i32, %arg1: memref<8x256xf32, #tpu.memory_space<vmem>>, %arg2: memref<256x128xf32, #tpu.memory_space<vmem>>, %arg3: memref<8x128xf32, #tpu.memory_space<vmem>>) attributes {dimension_semantics = [#tpu.dimension_semantics<parallel>], iteration_bounds = array<i64: 2>, scalar_prefetch = 0 : i64, scratch_operands = 0 : i64, tpu.core_type = #tpu.core_type<tc>, window_params = [{transform_indices = @transform_0, window_bounds = array<i64: 8, 256>}, {pipeline_mode = #tpu.pipeline_mode<synchronous>, transform_indices = @transform_1, window_bounds = array<i64: 256, 128>}, {transform_indices = @transform_2, window_bounds = array<i64: 8, 128>}]} {
    %c0 = arith.constant 0 : index
    %c0_0 = arith.constant 0 : index
    %0 = vector.load %arg1[%c0, %c0_0] : memref<8x256xf32, #tpu.memory_space<vmem>>, vector<8x256xf32>
    %c0_1 = arith.constant 0 : index
    %c0_2 = arith.constant 0 : index
    %1 = vector.load %arg2[%c0_1, %c0_2] : memref<256x128xf32, #tpu.memory_space<vmem>>, vector<256x128xf32>
    %cst = arith.constant dense<0.000000e+00> : vector<8x128xf32>
    %2 = tpu.matmul %0, %1, %cst {dimension_numbers = #tpu.dot_dimension_numbers<[1], [0], [0], [1], [0, 0, 1, 1], [], []>} : vector<8x256xf32>, vector<256x128xf32>, vector<8x128xf32> -> vector<8x128xf32>
    %c0_3 = arith.constant 0 : index
    %c0_4 = arith.constant 0 : index
    %3 = vector.load %arg3[%c0_3, %c0_4] : memref<8x128xf32, #tpu.memory_space<vmem>>, vector<8x128xf32>
    tpu.vector_store %arg3[%c0_3, %c0_4], %2 {strides = array<i32>} : memref<8x128xf32, #tpu.memory_space<vmem>>, vector<8x128xf32>,
    return
  }
  func.func @transform_0(%arg0: i32) -> (i32, i32) {
    %c0_i32 = arith.constant 0 : i32
    %c0_i32_0 = arith.constant 0 : i32
    return %arg0, %c0_i32 : i32, i32
  }
  func.func @transform_1(%arg0: i32) -> (i32, i32) {
    %c0_i32 = arith.constant 0 : i32
    %c0_i32_0 = arith.constant 0 : i32
    %c0_i32_1 = arith.constant 0 : i32
    return %c0_i32, %c0_i32_0 : i32, i32
  }
  func.func @transform_2(%arg0: i32) -> (i32, i32) {
    %c0_i32 = arith.constant 0 : i32
    %c0_i32_0 = arith.constant 0 : i32
    return %arg0, %c0_i32 : i32, i32
  }
}

</mosaic_0001>

<llo_original>
// kernel: downscale2d_forward.1
$region0: #{downscale2d_forward.1}
  #allocation0 [shape = 'u32[]', space=smem, size = 0x4, offset = 0x4, fixed_abs, tag = 'smem constant byte address 0x4 - core index']
  #allocation1 [shape = 'u32[144,128]{1,0:T(1,128)}', space=vmem, size = 0x12000, scoped, tag = 'internal scratch']
  %s0 = inlined_call_operand.vmem [shape: f32[16,256], index: 0, kind: input, shape index: {}]
  %s1 = inlined_call_operand.vmem [shape: f32[256,128], index: 1, kind: input, shape index: {}]
  %s2 = inlined_call_operand.vmem [shape: f32[16,128], index: 2, kind: output, shape index: {}]
  %s3 = sld [smem:[#allocation0]]
  $region41: #{downscale2d_forward.1} parent=0
    _
  %s5 = ssub.s32 1, %s3
  %s6 = scalar_select 0, %s5, %s3
  loop: start=0, step=1, limit=4
  $region2: #{downscale2d_forward.1} parent=0 // loop_pre_header
    _
  $region3: #{downscale2d_forward.1} parent=0 // loop_header
    %s8 = sphi 0, %s12
    %p9 = scmp.ge.s32.totalorder %s8, 4
    %s18 = sphi 0, %s20
    %s21 = sphi 0, %s18
    %s22 = sphi 0, %s21
    %s38 = sphi 0, %s22
    %s42 = sphi 0, %s42
    %s44 = sphi 0, %s42
    %s45 = sphi 0, %s44
    %s59 = sphi 0, %s45
    %s65 = sphi 0, %s67
    %s68 = sphi 0, %s65
    %s69 = sphi 0, %s68
    %s85 = sphi 0, %s69
  $region4: #{downscale2d_forward.1} parent=0 // loop_header_branch
    %11 = sbr.rel (%p9) target = $region8
  $region5: #{downscale2d_forward.1} parent=0 // loop_body
    %s13 = ssub.s32 %s8, 1
    %s14 = ssub.s32 %s8, 2
    %s15 = sadd.s32 %s8, 1
    %s16 = ssub.s32 %s8, %s15
    %p17 = scmp.eq.s32.totalorder %s16, 0
    %s19 = sadd.s32 %s18, 1
    %s20 = scalar_select %p17, %s18, %s19
    %p23 = pneg %p17
    %p24 = scmp.eq.s32.totalorder %s8, 1
    %p25 = por %p23, %p24
    %p26 = scmp.ne.s32.totalorder %s18, %s21
    %p27 = scmp.eq.s32.totalorder %s8, 0
    %p28 = por %p26, %p27
    %p29 = scmp.ne.s32.totalorder %s18, %s21
    %p30 = scmp.eq.s32.totalorder %s13, 1
    %p31 = por %p29, %p30
    %p32 = scmp.ne.s32.totalorder %s21, %s22
    %p33 = scmp.eq.s32.totalorder %s13, 0
    %p34 = por %p32, %p33
    %p35 = scmp.ne.s32.totalorder %s21, %s22
    %p36 = scmp.eq.s32.totalorder %s14, 1
    %p37 = por %p35, %p36
    %p39 = scmp.ne.s32.totalorder %s22, %s38
    %p40 = scmp.eq.s32.totalorder %s14, 0
    %p41 = por %p39, %p40
    %s43 = sadd.s32 %s42, 1
    %p46 = scmp.eq.s32.totalorder %s8, 1
    %p47 = scmp.ne.s32.totalorder %s42, %s44
    %p48 = scmp.eq.s32.totalorder %s8, 0
    %p49 = por %p47, %p48
    %p50 = scmp.ne.s32.totalorder %s42, %s44
    %p51 = scmp.eq.s32.totalorder %s13, 1
    %p52 = por %p50, %p51
    %p53 = scmp.ne.s32.totalorder %s44, %s45
    %p54 = scmp.eq.s32.totalorder %s13, 0
    %p55 = por %p53, %p54
    %p56 = scmp.ne.s32.totalorder %s44, %s45
    %p57 = scmp.eq.s32.totalorder %s14, 1
    %p58 = por %p56, %p57
    %p60 = scmp.ne.s32.totalorder %s45, %s59
    %p61 = scmp.eq.s32.totalorder %s14, 0
    %p62 = por %p60, %p61
    %s63 = ssub.s32 %s8, %s15
    %p64 = scmp.eq.s32.totalorder %s63, 0
    %s66 = sadd.s32 %s65, 1
    %s67 = scalar_select %p64, %s65, %s66
    %p70 = pneg %p64
    %p71 = scmp.eq.s32.totalorder %s8, 1
    %p72 = por %p70, %p71
    %p73 = scmp.ne.s32.totalorder %s65, %s68
    %p74 = scmp.eq.s32.totalorder %s8, 0
    %p75 = por %p73, %p74
    %p76 = scmp.ne.s32.totalorder %s65, %s68
    %p77 = scmp.eq.s32.totalorder %s13, 1
    %p78 = por %p76, %p77
    %p79 = scmp.ne.s32.totalorder %s68, %s69
    %p80 = scmp.eq.s32.totalorder %s13, 0
    %p81 = por %p79, %p80
    %p82 = scmp.ne.s32.totalorder %s68, %s69
    %p83 = scmp.eq.s32.totalorder %s14, 1
    %p84 = por %p82, %p83
    %p86 = scmp.ne.s32.totalorder %s69, %s85
    %p87 = scmp.eq.s32.totalorder %s14, 0
    %p88 = por %p86, %p87
    %p89 = scmp.le.s32.totalorder 1, %s8
    %p90 = scmp.lt.s32.totalorder %s8, 3
    %p91 = pnand %p89, %p90
    %p92 = pneg %p91
    // Predicated region
    $region9: #{downscale2d_forward.1} parent=5 // pred_check
      _
    $region10: #{downscale2d_forward.1} parent=5 // pred_check_branch
      %94 = sbr.rel (%p91) target = $region12
    $region11: #{downscale2d_forward.1} parent=5 // pred_region
      %s95 = ssub.s32 %s8, 1
      // Predicated region
      $region13: #{downscale2d_forward.1} parent=11 // pred_check
        %p96 = pneg %p55
      $region14: #{downscale2d_forward.1} parent=11 // pred_check_branch
        %98 = sbr.rel (%p96) target = $region16
      $region15: #{downscale2d_forward.1} parent=11 // pred_region
        _
      $region16: #{downscale2d_forward.1} parent=11 // pred_fallthru
        _
    $region12: #{downscale2d_forward.1} parent=5 // pred_fallthru
      _
    %p99 = scmp.lt.s32.totalorder %s8, 2
    // Predicated region
    $region17: #{downscale2d_forward.1} parent=5 // pred_check
      %p100 = pneg %p99
    $region18: #{downscale2d_forward.1} parent=5 // pred_check_branch
      %102 = sbr.rel (%p100) target = $region20
    $region19: #{downscale2d_forward.1} parent=5 // pred_region
      // Predicated region
      $region21: #{downscale2d_forward.1} parent=19 // pred_check
        %p103 = pneg %p28
      $region22: #{downscale2d_forward.1} parent=19 // pred_check_branch
        %105 = sbr.rel (%p103) target = $region24
      $region23: #{downscale2d_forward.1} parent=19 // pred_region
        %p106 = scmp.lt.s32.totalorder %s8, 1
        %s107 = scalar_select %p106, %s8, 1
        %s108 = smul.addr %s107, 2
        %s109 = smul.addr %s108, 8
        %s110 = scalar_lea.vmem %s0, %s109
      $region24: #{downscale2d_forward.1} parent=19 // pred_fallthru
        _
    $region20: #{downscale2d_forward.1} parent=5 // pred_fallthru
      _
    %p111 = scmp.le.s32.totalorder 1, %s8
    %p112 = scmp.lt.s32.totalorder %s8, 3
    %p113 = pnand %p111, %p112
    %p114 = pneg %p113
    // Predicated region
    $region25: #{downscale2d_forward.1} parent=5 // pred_check
      _
    $region26: #{downscale2d_forward.1} parent=5 // pred_check_branch
      %116 = sbr.rel (%p113) target = $region28
    $region27: #{downscale2d_forward.1} parent=5 // pred_region
      %s117 = ssub.s32 %s8, 1
      %p118 = scmp.lt.s32.totalorder %s13, 1
      %s119 = scalar_select %p118, %s13, 1
      %s120 = smul.addr %s119, 2
      %s121 = smul.addr %s120, 8
      %s122 = scalar_lea.vmem %s0, %s121
      %p123 = pneg %p34
      %p124 = pneg %p31
      %p125 = pneg %p55
      %p126 = pneg %p52
      %p127 = pneg %p81
      %p128 = pneg %p78
      %p129 = scmp.lt.s32.totalorder %s13, 1
      %s130 = scalar_select %p129, %s13, 1
      %s131 = smul.addr %s130, 8
      %s132 = scalar_lea.vmem %s2, %s131
      %p133 = scmp.lt.s32.totalorder %s13, 1
      %s134 = scalar_select %p133, %s13, 1
      %s135 = smul.addr %s134, 2
      %s136 = smul.addr %s135, 8
      %s137 = scalar_lea.vmem %s0, %s136
      %p138 = scmp.lt.s32.totalorder %s13, 1
      %s139 = scalar_select %p138, %s13, 1
      %s140 = smul.addr %s139, 8
      %s141 = scalar_lea.vmem %s2, %s140
      %v142 = vld [vmem:[%s137] sm:$0xff]
      %v143 = vld [vmem:[%s137 + $0x8] sm:$0xff]
      %v144 = vld [vmem:[%s1] sm:$0xff]
      %v145 = vld [vmem:[%s1 + $0x8] sm:$0xff]
      %v146 = vld [vmem:[%s1 + $0x10] sm:$0xff]
      %v147 = vld [vmem:[%s1 + $0x18] sm:$0xff]
      %v148 = vld [vmem:[%s1 + $0x20] sm:$0xff]
      %v149 = vld [vmem:[%s1 + $0x28] sm:$0xff]
      %v150 = vld [vmem:[%s1 + $0x30] sm:$0xff]
      %v151 = vld [vmem:[%s1 + $0x38] sm:$0xff]
      %v152 = vld [vmem:[%s1 + $0x40] sm:$0xff]
      %v153 = vld [vmem:[%s1 + $0x48] sm:$0xff]
      %v154 = vld [vmem:[%s1 + $0x50] sm:$0xff]
      %v155 = vld [vmem:[%s1 + $0x58] sm:$0xff]
      %v156 = vld [vmem:[%s1 + $0x60] sm:$0xff]
      %v157 = vld [vmem:[%s1 + $0x68] sm:$0xff]
      %v158 = vld [vmem:[%s1 + $0x70] sm:$0xff]
      %v159 = vld [vmem:[%s1 + $0x78] sm:$0xff]
      %v160 = vld [vmem:[%s1 + $0x80] sm:$0xff]
      %v161 = vld [vmem:[%s1 + $0x88] sm:$0xff]
      %v162 = vld [vmem:[%s1 + $0x90] sm:$0xff]
      %v163 = vld [vmem:[%s1 + $0x98] sm:$0xff]
      %v164 = vld [vmem:[%s1 + $0xa0] sm:$0xff]
      %v165 = vld [vmem:[%s1 + $0xa8] sm:$0xff]
      %v166 = vld [vmem:[%s1 + $0xb0] sm:$0xff]
      %v167 = vld [vmem:[%s1 + $0xb8] sm:$0xff]
      %v168 = vld [vmem:[%s1 + $0xc0] sm:$0xff]
      %v169 = vld [vmem:[%s1 + $0xc8] sm:$0xff]
      %v170 = vld [vmem:[%s1 + $0xd0] sm:$0xff]
      %v171 = vld [vmem:[%s1 + $0xd8] sm:$0xff]
      %v172 = vld [vmem:[%s1 + $0xe0] sm:$0xff]
      %v173 = vld [vmem:[%s1 + $0xe8] sm:$0xff]
      %v174 = vld [vmem:[%s1 + $0xf0] sm:$0xff]
      %v175 = vld [vmem:[%s1 + $0xf8] sm:$0xff]
      %176 = vmatprep.subr.mxu0 0.0
      %177 = vmatpush1.msra.mxu0 %v159
      %178 = vmatprep.subr.mxu0 0.0
      %179 = vmatpush1.msra.mxu0 %v158
      %180 = vmatprep.subr.mxu0 0.0
      %181 = vmatpush1.msra.mxu0 %v157
      %182 = vmatprep.subr.mxu0 0.0
      %183 = vmatpush1.msra.mxu0 %v156
      %184 = vmatprep.subr.mxu0 0.0
      %185 = vmatpush1.msra.mxu0 %v155
      %186 = vmatprep.subr.mxu0 0.0
      %187 = vmatpush1.msra.mxu0 %v154
      %188 = vmatprep.subr.mxu0 0.0
      %189 = vmatpush1.msra.mxu0 %v153
      %190 = vmatprep.subr.mxu0 0.0
      %191 = vmatpush1.msra.mxu0 %v152
      %192 = vmatprep.subr.mxu0 0.0
      %193 = vmatpush1.msra.mxu0 %v151
      %194 = vmatprep.subr.mxu0 0.0
      %195 = vmatpush1.msra.mxu0 %v150
      %196 = vmatprep.subr.mxu0 0.0
      %197 = vmatpush1.msra.mxu0 %v149
      %198 = vmatprep.subr.mxu0 0.0
      %199 = vmatpush1.msra.mxu0 %v148
      %200 = vmatprep.subr.mxu0 0.0
      %201 = vmatpush1.msra.mxu0 %v147
      %202 = vmatprep.subr.mxu0 0.0
      %203 = vmatpush1.msra.mxu0 %v146
      %204 = vmatprep.subr.mxu0 0.0
      %205 = vmatpush1.msra.mxu0 %v145
      %206 = vmatprep.subr.mxu0 0.0
      %207 = vmatpush1.msra.mxu0 %v144
      %208 = vmatprep.subr.mxu0 0.0
      %209 = vmatpush2.msra.mxu0 %v175
      %210 = vmatprep.subr.mxu0 0.0
      %211 = vmatpush2.msra.mxu0 %v174
      %212 = vmatprep.subr.mxu0 0.0
      %213 = vmatpush2.msra.mxu0 %v173
      %214 = vmatprep.subr.mxu0 0.0
      %215 = vmatpush2.msra.mxu0 %v172
      %216 = vmatprep.subr.mxu0 0.0
      %217 = vmatpush2.msra.mxu0 %v171
      %218 = vmatprep.subr.mxu0 0.0
      %219 = vmatpush2.msra.mxu0 %v170
      %220 = vmatprep.subr.mxu0 0.0
      %221 = vmatpush2.msra.mxu0 %v169
      %222 = vmatprep.subr.mxu0 0.0
      %223 = vmatpush2.msra.mxu0 %v168
      %224 = vmatprep.subr.mxu0 0.0
      %225 = vmatpush2.msra.mxu0 %v167
      %226 = vmatprep.subr.mxu0 0.0
      %227 = vmatpush2.msra.mxu0 %v166
      %228 = vmatprep.subr.mxu0 0.0
      %229 = vmatpush2.msra.mxu0 %v165
      %230 = vmatprep.subr.mxu0 0.0
      %231 = vmatpush2.msra.mxu0 %v164
      %232 = vmatprep.subr.mxu0 0.0
      %233 = vmatpush2.msra.mxu0 %v163
      %234 = vmatprep.subr.mxu0 0.0
      %235 = vmatpush2.msra.mxu0 %v162
      %236 = vmatprep.subr.mxu0 0.0
      %237 = vmatpush2.msra.mxu0 %v161
      %238 = vmatprep.subr.mxu0 0.0
      %239 = vmatpush2.msra.mxu0 %v160
      %240 = vmatprep.mubr.f32.mxu0 %v143
      %241 = vmatmul.mubr.f32.gmra.mxu0 %v142
      %v242 = vpop.f32.mrf.mxu0
      %v243 = vadd.f32 0.0, %v242
      %v244 = vpop.f32.mrf.mxu0
      %245 = vdwg.mxu0
      %246 = vst [vmem:[%s141] sm:$0xff] %v243
      %p247 = scmp.lt.s32.totalorder %s13, 1
      %s248 = scalar_select %p247, %s13, 1
      %s249 = smul.addr %s248, 8
      %s250 = scalar_lea.vmem %s2, %s249
      // Predicated region
      $region29: #{downscale2d_forward.1} parent=27 // pred_check
        %p251 = pneg %p78
      $region30: #{downscale2d_forward.1} parent=27 // pred_check_branch
        %253 = sbr.rel (%p251) target = $region32
      $region31: #{downscale2d_forward.1} parent=27 // pred_region
        _
      $region32: #{downscale2d_forward.1} parent=27 // pred_fallthru
        _
    $region28: #{downscale2d_forward.1} parent=5 // pred_fallthru
      _
    %p254 = scmp.le.s32.totalorder 2, %s8
    // Predicated region
    $region33: #{downscale2d_forward.1} parent=5 // pred_check
      %p255 = pneg %p254
    $region34: #{downscale2d_forward.1} parent=5 // pred_check_branch
      %257 = sbr.rel (%p255) target = $region36
    $region35: #{downscale2d_forward.1} parent=5 // pred_region
      %s258 = ssub.s32 %s8, 2
      // Predicated region
      $region37: #{downscale2d_forward.1} parent=35 // pred_check
        %p259 = pneg %p84
      $region38: #{downscale2d_forward.1} parent=35 // pred_check_branch
        %261 = sbr.rel (%p259) target = $region40
      $region39: #{downscale2d_forward.1} parent=35 // pred_region
        %p262 = scmp.lt.s32.totalorder %s14, 1
        %s263 = scalar_select %p262, %s14, 1
        %s264 = smul.addr %s263, 8
        %s265 = scalar_lea.vmem %s2, %s264
      $region40: #{downscale2d_forward.1} parent=35 // pred_fallthru
        _
    $region36: #{downscale2d_forward.1} parent=5 // pred_fallthru
      _
  $region6: #{downscale2d_forward.1} parent=0 // loop_footer
    %s12 = sadd.s32 1, %s8
  $region7: #{downscale2d_forward.1} parent=0 // loop_footer_branch
    %7 = sbr.rel target = $region3
  $region8: #{downscale2d_forward.1} parent=0 // loop_exit
    _

</llo_original>
